<compile_context>
chip_gen: v6e
topology: v6e:2x2x1
jax: 0.10.0
libtpu: 0.0.40
codegen_flags: <defaults>
</compile_context>

<pallas_src>
import math

import jax
import jax.numpy as jnp
from jax.experimental import pallas as pl
from jax.experimental.pallas import tpu as pltpu


def _pruned_conv_matmul_kernel(w_ref, m_ref, x_ref, o_ref):
    # w_ref, m_ref : (Cout, K*K*Cin)   weight and pruning mask
    # x_ref        : (K*K*Cin, TM)     im2col patch columns (transposed)
    # o_ref        : (Cout, TM)        lane-dense output slab (TM % 128 == 0)
    wm = w_ref[...] * m_ref[...]       # "self.conv.weight * self.mask"
    o_ref[...] = jnp.dot(
        wm, x_ref[...], preferred_element_type=jnp.float32
    ).astype(o_ref.dtype)


def _round_up(a, b):
    return ((a + b - 1) // b) * b


def pruned_conv_forward(x_nchw, weight_oihw, mask_oihw, *, stride=1, padding=0,
                        max_block_cols=2048):
    """Masked conv2d forward. x: (N, Cin, H, W); weight/mask: (O, Cin, K, K)."""
    N, C, H, W = x_nchw.shape
    O, _, K, _ = weight_oihw.shape
    H_out = (H + 2 * padding - K) // stride + 1
    W_out = (W + 2 * padding - K) // stride + 1
    KKC = K * K * C

    # ---------- wrapper-side layout plumbing (no arithmetic) ----------------
    # pad spatially, NCHW -> NHWC (channels minor)
    x_pad = jnp.pad(x_nchw, ((0, 0), (0, 0), (padding, padding), (padding, padding)))
    x_nhwc = jnp.transpose(x_pad, (0, 2, 3, 1))              # (N, Hp, Wp, C)

    # im2col, already transposed: rows ordered (kh, kw, c), cols (n, h_out, w_out)
    patches = []
    for kh in range(K):
        for kw in range(K):
            sl = x_nhwc[:, kh:kh + (H_out - 1) * stride + 1:stride,
                        kw:kw + (W_out - 1) * stride + 1:stride, :]
            patches.append(sl)                               # (N, Ho, Wo, C)
    x_st = jnp.stack(patches, axis=0)                        # (K*K, N, Ho, Wo, C)
    x_cols = jnp.transpose(x_st, (0, 4, 1, 2, 3)).reshape(KKC, N * H_out * W_out)

    # weight / mask: OIHW -> (O, K, K, C) -> (O, K*K*C); same (kh, kw, c) order
    w2d = jnp.transpose(weight_oihw, (0, 2, 3, 1)).reshape(O, KKC)
    m2d = jnp.transpose(mask_oihw, (0, 2, 3, 1)).reshape(O, KKC)

    # column blocking: lane-dense blocks (multiple of 128) of the fused
    # (batch, h_out, w_out) dimension; pad columns so the grid divides evenly
    M_total = N * H_out * W_out
    TM = min(_round_up(M_total, 128), max_block_cols)
    M_pad = _round_up(M_total, TM)
    if M_pad != M_total:
        x_cols = jnp.pad(x_cols, ((0, 0), (0, M_pad - M_total)))

    out_2d = pl.pallas_call(
        _pruned_conv_matmul_kernel,
        out_shape=jax.ShapeDtypeStruct((O, M_pad), jnp.float32),
        grid_spec=pltpu.PrefetchScalarGridSpec(
            num_scalar_prefetch=0,
            grid=(M_pad // TM,),
            in_specs=[
                pl.BlockSpec((O, KKC), lambda i: (0, 0)),    # weight (resident)
                pl.BlockSpec((O, KKC), lambda i: (0, 0)),    # mask   (resident)
                pl.BlockSpec((KKC, TM), lambda i: (0, i)),   # im2col column block
            ],
            out_specs=pl.BlockSpec((O, TM), lambda i: (0, i)),
        ),
        compiler_params=pltpu.CompilerParams(
            dimension_semantics=("parallel",),               # v7x: split across 2 TCs
        ),
    )(w2d, m2d, x_cols)

    # un-fold back to NCHW: (O, M) -> (O, N, Ho, Wo) -> (N, O, Ho, Wo)
    out = out_2d[:, :M_total].reshape(O, N, H_out, W_out)
    return jnp.transpose(out, (1, 0, 2, 3))


if __name__ == "__main__":
    # Module config: PrunedConv(in_channels=4, out_channels=8, kernel_size=3,
    #                           stride=1, padding=1, bias=False)
    in_channels, out_channels, kernel_size, stride, padding = 4, 8, 3, 1, 1
    N, H, W = 2, 16, 16

    key = jax.random.PRNGKey(0)
    kx, kw = jax.random.split(key)

    # deterministic parameter init matching PrunedConv.__init__:
    #   n = K*K*out, m = K*K*in ; weight ~ N(0, sqrt(2/(n+m)))
    n = kernel_size * kernel_size * out_channels
    m = kernel_size * kernel_size * in_channels
    std = math.sqrt(2.0 / (n + m))
    weight = std * jax.random.normal(
        kw, (out_channels, in_channels, kernel_size, kernel_size), jnp.float32)

    # non-trivial pruning mask (what prune_by_std(s=0.25) would produce), so the
    # in-kernel mask multiply is actually exercised; __init__ default is ones.
    mask = (jnp.abs((weight - weight.mean()) / weight.std()) > 0.25).astype(jnp.float32)

    x = jax.random.normal(kx, (N, in_channels, H, W), jnp.float32)

    out = pruned_conv_forward(x, weight, mask, stride=stride, padding=padding)
    out = jax.block_until_ready(out)

    # reference: XLA conv on masked weights (NCHW / OIHW)
    ref = jax.lax.conv_general_dilated(
        x, weight * mask, (stride, stride),
        [(padding, padding), (padding, padding)],
        dimension_numbers=("NCHW", "OIHW", "NCHW"))
    if not jnp.allclose(out, ref, atol=1e-4, rtol=1e-4):
        raise AssertionError("Pallas PrunedConv mismatch vs reference (stride=1)")

    # secondary check: stride=2 path (reviewer correctness concern)
    out2 = jax.block_until_ready(
        pruned_conv_forward(x, weight, mask, stride=2, padding=1))
    ref2 = jax.lax.conv_general_dilated(
        x, weight * mask, (2, 2), [(1, 1), (1, 1)],
        dimension_numbers=("NCHW", "OIHW", "NCHW"))
    if not jnp.allclose(out2, ref2, atol=1e-4, rtol=1e-4):
        raise AssertionError("Pallas PrunedConv mismatch vs reference (stride=2)")

    print("KERNEL_OK")
</pallas_src>

<mosaic_0001>
module attributes {stable_mosaic.version = 11 : i64} {
  func.func @_pruned_conv_matmul_kernel(%arg0: i32, %arg1: memref<8x36xf32, #tpu.memory_space<vmem>>, %arg2: memref<8x36xf32, #tpu.memory_space<vmem>>, %arg3: memref<36x512xf32, #tpu.memory_space<vmem>>, %arg4: memref<8x512xf32, #tpu.memory_space<vmem>>) attributes {dimension_semantics = [#tpu.dimension_semantics<parallel>], iteration_bounds = array<i64: 1>, scalar_prefetch = 0 : i64, scratch_operands = 0 : i64, tpu.core_type = #tpu.core_type<tc>, window_params = [{pipeline_mode = #tpu.pipeline_mode<synchronous>, transform_indices = @transform_0, window_bounds = array<i64: 8, 36>}, {pipeline_mode = #tpu.pipeline_mode<synchronous>, transform_indices = @transform_1, window_bounds = array<i64: 8, 36>}, {transform_indices = @transform_2, window_bounds = array<i64: 36, 512>}, {transform_indices = @transform_3, window_bounds = array<i64: 8, 512>}]} {
    %c0 = arith.constant 0 : index
    %c0_0 = arith.constant 0 : index
    %0 = vector.load %arg1[%c0, %c0_0] : memref<8x36xf32, #tpu.memory_space<vmem>>, vector<8x36xf32>
    %c0_1 = arith.constant 0 : index
    %c0_2 = arith.constant 0 : index
    %1 = vector.load %arg2[%c0_1, %c0_2] : memref<8x36xf32, #tpu.memory_space<vmem>>, vector<8x36xf32>
    %2 = arith.mulf %0, %1 : vector<8x36xf32>
    %c0_3 = arith.constant 0 : index
    %c0_4 = arith.constant 0 : index
    %3 = vector.load %arg3[%c0_3, %c0_4] : memref<36x512xf32, #tpu.memory_space<vmem>>, vector<36x512xf32>
    %cst = arith.constant dense<0.000000e+00> : vector<8x512xf32>
    %4 = tpu.matmul %2, %3, %cst {dimension_numbers = #tpu.dot_dimension_numbers<[1], [0], [0], [1], [0, 0, 1, 1], [], []>} : vector<8x36xf32>, vector<36x512xf32>, vector<8x512xf32> -> vector<8x512xf32>
    %c0_5 = arith.constant 0 : index
    %c0_6 = arith.constant 0 : index
    %5 = vector.load %arg4[%c0_5, %c0_6] : memref<8x512xf32, #tpu.memory_space<vmem>>, vector<8x512xf32>
    tpu.vector_store %arg4[%c0_5, %c0_6], %4 {strides = array<i32>} : memref<8x512xf32, #tpu.memory_space<vmem>>, vector<8x512xf32>,
    return
  }
  func.func @transform_0(%arg0: i32) -> (i32, i32) {
    %c0_i32 = arith.constant 0 : i32
    %c0_i32_0 = arith.constant 0 : i32
    %c0_i32_1 = arith.constant 0 : i32
    return %c0_i32, %c0_i32_0 : i32, i32
  }
  func.func @transform_1(%arg0: i32) -> (i32, i32) {
    %c0_i32 = arith.constant 0 : i32
    %c0_i32_0 = arith.constant 0 : i32
    %c0_i32_1 = arith.constant 0 : i32
    return %c0_i32, %c0_i32_0 : i32, i32
  }
  func.func @transform_2(%arg0: i32) -> (i32, i32) {
    %c0_i32 = arith.constant 0 : i32
    %c0_i32_0 = arith.constant 0 : i32
    return %c0_i32, %arg0 : i32, i32
  }
  func.func @transform_3(%arg0: i32) -> (i32, i32) {
    %c0_i32 = arith.constant 0 : i32
    %c0_i32_0 = arith.constant 0 : i32
    return %c0_i32, %arg0 : i32, i32
  }
}

</mosaic_0001>

<llo_original>
// kernel: tpu_custom_call.1
$region0: #{tpu_custom_call.1}
  #allocation0 [shape = 'u32[]', space=smem, size = 0x4, offset = 0x4, fixed_abs, tag = 'smem constant byte address 0x4 - core index']
  #allocation1 [shape = 'u32[144,128]{1,0:T(1,128)}', space=vmem, size = 0x12000, scoped, tag = 'internal scratch']
  %s0 = inlined_call_operand.hbm [shape: f32[8,36], index: 0, kind: input, shape index: {}]
  %s1 = inlined_call_operand.hbm [shape: f32[8,36], index: 1, kind: input, shape index: {}]
  %s2 = inlined_call_operand.hbm [shape: f32[36,512], index: 2, kind: input, shape index: {}]
  %s3 = inlined_call_operand.hbm [shape: f32[8,512], index: 3, kind: output, shape index: {}]
  %s4 = sld [smem:[#allocation0]]
  $region34: #{tpu_custom_call.1} parent=0
    _
  %s6 = ssub.s32 1, %s4
  %s7 = scalar_select 0, %s6, %s4
  $region1: #{tpu_custom_call.1} parent=0
    #allocation2 [shape = 'u8[4096]{0}', space=vmem, size = 0x1000, scoped, tag = 'input window, operand 0, single buffered']
    #allocation3 [shape = 's32[1]{0}', space=sflag, size = 0x4, scoped, tag = 'scoped memory for tpu_custom_call.1']
    #allocation4 [shape = 's32[1]{0}', space=sflag, size = 0x4, scoped, tag = 'scoped memory for tpu_custom_call.1']
    #allocation5 [shape = 'u8[4096]{0}', space=vmem, size = 0x1000, scoped, tag = 'input window, operand 1, single buffered']
    #allocation6 [shape = 's32[1]{0}', space=sflag, size = 0x4, scoped, tag = 'scoped memory for tpu_custom_call.1']
    #allocation7 [shape = 'u8[81920]{0}', space=vmem, size = 0x14000, scoped, tag = 'input window, operand 2, single buffered']
    #allocation8 [shape = 'u8[16384]{0}', space=vmem, size = 0x4000, scoped, tag = 'output window, operand 0, single buffered']
    %8 = vsyncpa [#allocation3], 0
    %9 = vsyncpa [#allocation6], 0
    %10 = vsyncpa [#allocation4], 0
    // Predicated region
    $region2: #{tpu_custom_call.1} parent=1 // pred_check
      _
    $region3: #{tpu_custom_call.1} parent=1 // pred_check_branch
      %12 = sbr.rel (0) target = $region5
    $region4: #{tpu_custom_call.1} parent=1 // pred_region
      %s14 = ssub.s32 128, 128
      %15 = vsyncadd [#allocation3], %s14
      %s17 = sshll.u32 [#allocation2], 4
      %s18 = int_to_ptr.vmem [resolvable:$true] %s17
      %20 = dma.hbm_to_vmem [thread:$0]  %s0, 128, %s18, [#allocation3]
    $region5: #{tpu_custom_call.1} parent=1 // pred_fallthru
      _
    // Predicated region
    $region6: #{tpu_custom_call.1} parent=1 // pred_check
      _
    $region7: #{tpu_custom_call.1} parent=1 // pred_check_branch
      %22 = sbr.rel (0) target = $region9
    $region8: #{tpu_custom_call.1} parent=1 // pred_region
      %s24 = ssub.s32 128, 128
      %25 = vsyncadd [#allocation6], %s24
      %s27 = sshll.u32 [#allocation5], 4
      %s28 = int_to_ptr.vmem [resolvable:$true] %s27
      %30 = dma.hbm_to_vmem [thread:$0]  %s1, 128, %s28, [#allocation6]
    $region9: #{tpu_custom_call.1} parent=1 // pred_fallthru
      _
    // Predicated region
    $region10: #{tpu_custom_call.1} parent=1 // pred_check
      _
    $region11: #{tpu_custom_call.1} parent=1 // pred_check_branch
      %32 = sbr.rel (0) target = $region13
    $region12: #{tpu_custom_call.1} parent=1 // pred_region
      %s34 = ssub.s32 2560, 2560
      %35 = vsyncadd [#allocation6], %s34
      %s36 = sshll.u32 [#allocation7], 4
      %s37 = int_to_ptr.vmem [resolvable:$true] %s36
      %42 = dma.hbm_to_vmem [thread:$0]  %s2, 2560, %s37, [#allocation6], 512, 512, 32
    $region13: #{tpu_custom_call.1} parent=1 // pred_fallthru
      _
    // Predicated region
    $region14: #{tpu_custom_call.1} parent=1 // pred_check
      _
    $region15: #{tpu_custom_call.1} parent=1 // pred_check_branch
      %44 = sbr.rel (0) target = $region17
    $region16: #{tpu_custom_call.1} parent=1 // pred_region
      %45 = dma.done [#allocation3], 128
    $region17: #{tpu_custom_call.1} parent=1 // pred_fallthru
      _
    // Predicated region
    $region18: #{tpu_custom_call.1} parent=1 // pred_check
      _
    $region19: #{tpu_custom_call.1} parent=1 // pred_check_branch
      %47 = sbr.rel (0) target = $region21
    $region20: #{tpu_custom_call.1} parent=1 // pred_region
      %48 = dma.done [#allocation6], 128
    $region21: #{tpu_custom_call.1} parent=1 // pred_fallthru
      _
    // Predicated region
    $region22: #{tpu_custom_call.1} parent=1 // pred_check
      _
    $region23: #{tpu_custom_call.1} parent=1 // pred_check_branch
      %50 = sbr.rel (0) target = $region25
    $region24: #{tpu_custom_call.1} parent=1 // pred_region
      %51 = dma.done [#allocation6], 2560
    $region25: #{tpu_custom_call.1} parent=1 // pred_fallthru
      _
    %v52 = vld [vmem:[#allocation2] sm:$0xff]
    %v53 = vld [vmem:[#allocation5] sm:$0xff]
    %v54 = vmul.f32 %v52, %v53
    %v55 = vld [vmem:[#allocation7] sm:$0xff]
    %v56 = vld [vmem:[#allocation7 + $0x8] sm:$0xff]
    %v57 = vld [vmem:[#allocation7 + $0x10] sm:$0xff]
    %v58 = vld [vmem:[#allocation7 + $0x18] sm:$0xff]
    %v59 = vld [vmem:[#allocation7 + $0x20] sm:$0xff]
    %v60 = vld [vmem:[#allocation7 + $0x28] sm:$0xff]
    %v61 = vld [vmem:[#allocation7 + $0x30] sm:$0xff]
    %v62 = vld [vmem:[#allocation7 + $0x38] sm:$0xff]
    %v63 = vld [vmem:[#allocation7 + $0x40] sm:$0xff]
    %v64 = vld [vmem:[#allocation7 + $0x48] sm:$0xff]
    %v65 = vld [vmem:[#allocation7 + $0x50] sm:$0xff]
    %v66 = vld [vmem:[#allocation7 + $0x58] sm:$0xff]
    %v67 = vld [vmem:[#allocation7 + $0x60] sm:$0xff]
    %v68 = vld [vmem:[#allocation7 + $0x68] sm:$0xff]
    %v69 = vld [vmem:[#allocation7 + $0x70] sm:$0xff]
    %v70 = vld [vmem:[#allocation7 + $0x78] sm:$0xff]
    %v71 = vld [vmem:[#allocation7 + $0x80] sm:$0xf]
    %v72 = vld [vmem:[#allocation7 + $0x88] sm:$0xf]
    %v73 = vld [vmem:[#allocation7 + $0x90] sm:$0xf]
    %v74 = vld [vmem:[#allocation7 + $0x98] sm:$0xf]
    %vm75 = vcmask 293888
    %v77 = vsel %vm75, %v54, 0
    %vm79 = vcmask 1043456
    %v81 = vsel %vm79, %v71, 0
    %v84 = vsel %vm79, %v72, 0
    %v87 = vsel %vm79, %v73, 0
    %v90 = vsel %vm79, %v74, 0
    %92 = vmatprep.subr.mxu0 0.0
    %93 = vmatpush1.msra.mxu0 0.0
    %94 = vmatprep.subr.mxu0 0.0
    %95 = vmatpush1.msra.mxu0 0.0
    %96 = vmatprep.subr.mxu0 0.0
    %97 = vmatpush1.msra.mxu0 0.0
    %98 = vmatprep.subr.mxu0 0.0
    %99 = vmatpush1.msra.mxu0 0.0
    %100 = vmatprep.subr.mxu0 0.0
    %101 = vmatpush1.msra.mxu0 0.0
    %102 = vmatprep.subr.mxu0 0.0
    %103 = vmatpush1.msra.mxu0 0.0
    %104 = vmatprep.subr.mxu0 0.0
    %105 = vmatpush1.msra.mxu0 0.0
    %106 = vmatprep.subr.mxu0 0.0
    %107 = vmatpush1.msra.mxu0 0.0
    %108 = vmatprep.subr.mxu0 0.0
    %109 = vmatpush1.msra.mxu0 0.0
    %110 = vmatprep.subr.mxu0 0.0
    %111 = vmatpush1.msra.mxu0 0.0
    %112 = vmatprep.subr.mxu0 0.0
    %113 = vmatpush1.msra.mxu0 0.0
    %114 = vmatprep.subr.mxu0 %v84
    %115 = vmatpush1.msra.mxu0 %v81
    %116 = vmatprep.subr.mxu0 %v68
    %117 = vmatpush1.msra.mxu0 %v67
    %118 = vmatprep.subr.mxu0 %v64
    %119 = vmatpush1.msra.mxu0 %v63
    %120 = vmatprep.subr.mxu0 %v60
    %121 = vmatpush1.msra.mxu0 %v59
    %122 = vmatprep.subr.mxu0 %v56
    %123 = vmatpush1.msra.mxu0 %v55
    %124 = vmatprep.subr.mxu0 0.0
    %125 = vmatpush2.msra.mxu0 0.0
    %126 = vmatprep.subr.mxu0 0.0
    %127 = vmatpush2.msra.mxu0 0.0
    %128 = vmatprep.subr.mxu0 0.0
    %129 = vmatpush2.msra.mxu0 0.0
    %130 = vmatprep.subr.mxu0 0.0
    %131 = vmatpush2.msra.mxu0 0.0
    %132 = vmatprep.subr.mxu0 0.0
    %133 = vmatpush2.msra.mxu0 0.0
    %134 = vmatprep.subr.mxu0 0.0
    %135 = vmatpush2.msra.mxu0 0.0
    %136 = vmatprep.subr.mxu0 0.0
    %137 = vmatpush2.msra.mxu0 0.0
    %138 = vmatprep.subr.mxu0 0.0
    %139 = vmatpush2.msra.mxu0 0.0
    %140 = vmatprep.subr.mxu0 0.0
    %141 = vmatpush2.msra.mxu0 0.0
    %142 = vmatprep.subr.mxu0 0.0
    %143 = vmatpush2.msra.mxu0 0.0
    %144 = vmatprep.subr.mxu0 0.0
    %145 = vmatpush2.msra.mxu0 0.0
    %146 = vmatprep.subr.mxu0 0.0
    %147 = vmatpush2.msra.mxu0 0.0
    %148 = vmatprep.subr.mxu0 0.0
    %149 = vmatpush2.msra.mxu0 0.0
    %150 = vmatprep.subr.mxu0 0.0
    %151 = vmatpush2.msra.mxu0 0.0
    %152 = vmatprep.subr.mxu0 0.0
    %153 = vmatpush2.msra.mxu0 0.0
    %154 = vmatprep.subr.mxu0 0.0
    %155 = vmatpush2.msra.mxu0 0.0
    %156 = vmatprep.mubr.f32.mxu0 0.0
    %157 = vmatmul.mubr.f32.gmra.mxu0 %v77
    %v158 = vpop.f32.mrf.mxu0
    %v159 = vadd.f32 0.0, %v158
    %v160 = vpop.f32.mrf.mxu0
    %v161 = vadd.f32 0.0, %v160
    %162 = vdwg.mxu0
    %163 = vmatprep.subr.mxu0 0.0
    %164 = vmatpush1.msra.mxu0 0.0
    %165 = vmatprep.subr.mxu0 0.0
    %166 = vmatpush1.msra.mxu0 0.0
    %167 = vmatprep.subr.mxu0 0.0
    %168 = vmatpush1.msra.mxu0 0.0
    %169 = vmatprep.subr.mxu0 0.0
    %170 = vmatpush1.msra.mxu0 0.0
    %171 = vmatprep.subr.mxu0 0.0
    %172 = vmatpush1.msra.mxu0 0.0
    %173 = vmatprep.subr.mxu0 0.0
    %174 = vmatpush1.msra.mxu0 0.0
    %175 = vmatprep.subr.mxu0 0.0
    %176 = vmatpush1.msra.mxu0 0.0
    %177 = vmatprep.subr.mxu0 0.0
    %178 = vmatpush1.msra.mxu0 0.0
    %179 = vmatprep.subr.mxu0 0.0
    %180 = vmatpush1.msra.mxu0 0.0
    %181 = vmatprep.subr.mxu0 0.0
    %182 = vmatpush1.msra.mxu0 0.0
    %183 = vmatprep.subr.mxu0 0.0
    %184 = vmatpush1.msra.mxu0 0.0
    %185 = vmatprep.subr.mxu0 %v90
    %186 = vmatpush1.msra.mxu0 %v87
    %187 = vmatprep.subr.mxu0 %v70
    %188 = vmatpush1.msra.mxu0 %v69
    %189 = vmatprep.subr.mxu0 %v66
    %190 = vmatpush1.msra.mxu0 %v65
    %191 = vmatprep.subr.mxu0 %v62
    %192 = vmatpush1.msra.mxu0 %v61
    %193 = vmatprep.subr.mxu0 %v58
    %194 = vmatpush1.msra.mxu0 %v57
    %195 = vmatprep.subr.mxu0 0.0
    %196 = vmatpush2.msra.mxu0 0.0
    %197 = vmatprep.subr.mxu0 0.0
    %198 = vmatpush2.msra.mxu0 0.0
    %199 = vmatprep.subr.mxu0 0.0
    %200 = vmatpush2.msra.mxu0 0.0
    %201 = vmatprep.subr.mxu0 0.0
    %202 = vmatpush2.msra.mxu0 0.0
    %203 = vmatprep.subr.mxu0 0.0
    %204 = vmatpush2.msra.mxu0 0.0
    %205 = vmatprep.subr.mxu0 0.0
    %206 = vmatpush2.msra.mxu0 0.0
    %207 = vmatprep.subr.mxu0 0.0
    %208 = vmatpush2.msra.mxu0 0.0
    %209 = vmatprep.subr.mxu0 0.0
    %210 = vmatpush2.msra.mxu0 0.0
    %211 = vmatprep.subr.mxu0 0.0
    %212 = vmatpush2.msra.mxu0 0.0
    %213 = vmatprep.subr.mxu0 0.0
    %214 = vmatpush2.msra.mxu0 0.0
    %215 = vmatprep.subr.mxu0 0.0
    %216 = vmatpush2.msra.mxu0 0.0
    %217 = vmatprep.subr.mxu0 0.0
    %218 = vmatpush2.msra.mxu0 0.0
    %219 = vmatprep.subr.mxu0 0.0
    %220 = vmatpush2.msra.mxu0 0.0
    %221 = vmatprep.subr.mxu0 0.0
    %222 = vmatpush2.msra.mxu0 0.0
    %223 = vmatprep.subr.mxu0 0.0
    %224 = vmatpush2.msra.mxu0 0.0
    %225 = vmatprep.subr.mxu0 0.0
    %226 = vmatpush2.msra.mxu0 0.0
    %227 = vmatprep.mubr.f32.mxu0 0.0
    %228 = vmatmul.mubr.f32.gmra.mxu0 %v77
    %v229 = vpop.f32.mrf.mxu0
    %v230 = vadd.f32 0.0, %v229
    %v231 = vpop.f32.mrf.mxu0
    %v232 = vadd.f32 0.0, %v231
    %233 = vdwg.mxu0
    %234 = vst [vmem:[#allocation8] sm:$0xff] %v159
    %235 = vst [vmem:[#allocation8 + $0x8] sm:$0xff] %v161
    %236 = vst [vmem:[#allocation8 + $0x10] sm:$0xff] %v230
    %237 = vst [vmem:[#allocation8 + $0x18] sm:$0xff] %v232
    // Predicated region
    $region26: #{tpu_custom_call.1} parent=1 // pred_check
      _
    $region27: #{tpu_custom_call.1} parent=1 // pred_check_branch
      %239 = sbr.rel (0) target = $region29
    $region28: #{tpu_custom_call.1} parent=1 // pred_region
      %s241 = ssub.s32 512, 512
      %242 = vsyncadd [#allocation4], %s241
      %s244 = sshll.u32 [#allocation8], 4
      %s245 = int_to_ptr.vmem [resolvable:$true] %s244
      %247 = dma.vmem_to_hbm [thread:$0]  %s245, 512, %s3, [#allocation4]
    $region29: #{tpu_custom_call.1} parent=1 // pred_fallthru
      _
    // Predicated region
    $region30: #{tpu_custom_call.1} parent=1 // pred_check
      _
    $region31: #{tpu_custom_call.1} parent=1 // pred_check_branch
      %249 = sbr.rel (0) target = $region33
    $region32: #{tpu_custom_call.1} parent=1 // pred_region
      %250 = dma.done [#allocation4], 512
    $region33: #{tpu_custom_call.1} parent=1 // pred_fallthru
      _
    %251 = vsyncpa [#allocation3], 1
    %252 = vsyncpa [#allocation6], 1
    %253 = vsyncpa [#allocation4], 1

</llo_original>
